<compile_context>
chip_gen: v7x
topology: tpu7x:2x2x1
jax: 0.10.0
libtpu: 0.0.40
codegen_flags: <defaults>
</compile_context>

<pallas_src>
import functools
import math

import jax
import jax.numpy as jnp
from jax.experimental import pallas as pl
from jax.experimental.pallas import tpu as pltpu


def _binarization_loss_kernel(hard_ref, soft_ref, num_ref, den_ref,
                              num_acc, den_acc, *,
                              eps, tile_r, n_cols, tiles_per_split,
                              n_rows, first_masked_tile, any_masked,
                              n_chunks, acc_rows):
    j = pl.program_id(0)          # megacore split (parallel axis)
    i = pl.program_id(1)          # reduction step within the split (arbitrary)

    @pl.when(i == 0)
    def _():
        num_acc[...] = jnp.zeros_like(num_acc)
        den_acc[...] = jnp.zeros_like(den_acc)

    hard = hard_ref[...].astype(jnp.float32)   # (tile_r, 128)
    soft = soft_ref[...].astype(jnp.float32)   # (tile_r, 128)

    def _accumulate(num_tile, den_tile):
        # Reduce the per-step contribution down to the small accumulator shape
        # before the += (removes ~all vector stores from the hot loop).
        num_acc[...] += num_tile.reshape(n_chunks, acc_rows, n_cols).sum(axis=0)
        den_acc[...] += den_tile.reshape(n_chunks, acc_rows, n_cols).sum(axis=0)

    def _interior():
        # NOTE: exact '== 1.0' compare matches the PyTorch reference; it
        # assumes hard_attention is exact 0/1 floats (same hazard as original).
        sel = hard == jnp.float32(1.0)
        # log(1) = 0 for unselected positions -> no second select needed.
        num_tile = jnp.log(jnp.maximum(jnp.where(sel, soft, jnp.float32(1.0)),
                                       jnp.float32(eps)))
        _accumulate(num_tile, hard)

    tile_id = j * tiles_per_split + i          # global (unclamped) tile id

    if not any_masked:
        _interior()
    else:
        @pl.when(tile_id < first_masked_tile)
        def _():
            _interior()

        @pl.when(tile_id >= first_masked_tile)
        def _():
            # Ragged edge tile or phantom tile (index_map clamped): mask rows
            # beyond n_rows so garbage data never contributes.
            row = jax.lax.broadcasted_iota(jnp.int32, (tile_r, n_cols), 0)
            valid = (tile_id * tile_r + row) < n_rows
            sel = jnp.logical_and(valid, hard == jnp.float32(1.0))
            num_tile = jnp.log(
                jnp.maximum(jnp.where(sel, soft, jnp.float32(1.0)),
                            jnp.float32(eps)))
            den_tile = jnp.where(valid, hard, jnp.float32(0.0))
            _accumulate(num_tile, den_tile)

    # Single final reduce + scalar store per split.
    @pl.when(i == pl.num_programs(1) - 1)
    def _():
        num_ref[0, 0] = jnp.sum(num_acc[...])
        den_ref[0, 0] = jnp.sum(den_acc[...])


def _default_num_splits():
    """2 splits only on dual-TensorCore (megacore) chips; 1 otherwise."""
    try:
        kind = jax.devices()[0].device_kind.lower()
    except Exception:
        return 1
    if "lite" in kind or "v5e" in kind or "v6e" in kind:
        return 1                                   # single-TC chips
    if "v7" in kind or "v4" in kind or "v5p" in kind or kind.strip() == "tpu v5":
        return 2                                   # megacore / dual-TC chips
    return 1


def attention_binarization_loss(hard_attention, soft_attention, eps=1e-12,
                                *, max_tile_rows=4096, num_splits=None):
    """Pallas implementation of AttentionBinarizationLoss.forward."""
    assert hard_attention.shape == soft_attention.shape
    assert max_tile_rows % 8 == 0

    n = math.prod(hard_attention.shape)
    n_cols = 128

    if num_splits is None:
        num_splits = _default_num_splits()

    flat_h = hard_attention.reshape(-1)
    flat_s = soft_attention.reshape(-1)

    n_rows = n // n_cols                    # full lane-aligned rows
    n_full = n_rows * n_cols
    n_rem = n - n_full

    # <128-element ragged tail handled with plain jnp -- no HBM pad copy.
    if n_rem:
        tail_h = flat_h[n_full:].astype(jnp.float32)
        tail_s = flat_s[n_full:].astype(jnp.float32)
        tail_num = jnp.sum(jnp.where(tail_h == 1.0,
                                     jnp.log(jnp.maximum(tail_s, eps)), 0.0))
        tail_den = jnp.sum(tail_h)
    else:
        tail_num = jnp.float32(0.0)
        tail_den = jnp.float32(0.0)

    if n_rows == 0:   # tiny input: everything lives in the tail
        return -tail_num / tail_den

    h2 = flat_h[:n_full].reshape(n_rows, n_cols)
    s2 = flat_s[:n_full].reshape(n_rows, n_cols)

    tile_r = min(max_tile_rows, n_rows)       # full dim if small (always legal)
    total_tiles = pl.cdiv(n_rows, tile_r)
    num_splits = max(1, min(num_splits, total_tiles))
    tiles_per_split = pl.cdiv(total_tiles, num_splits)

    # Tiles with id >= first_masked_tile need row masking (ragged edge tile or
    # phantom tiles created by the split clamping).
    first_masked_tile = n_rows // tile_r
    any_masked = num_splits * tiles_per_split > first_masked_tile

    # Small persistent accumulator: one (8,128) vreg when tile_r is a multiple
    # of 8, otherwise (tile_r,128) (only happens for single-tile small inputs).
    if tile_r > 8 and tile_r % 8 == 0:
        acc_rows = 8
    else:
        acc_rows = tile_r
    n_chunks = tile_r // acc_rows

    def tile_map(sj, si):
        # Clamp so phantom tiles (past the end of the last split) re-read the
        # last real tile; the kernel masks their contribution to zero.
        t = jnp.minimum(sj * tiles_per_split + si, total_tiles - 1)
        return (t, 0)

    scalar_out = jax.ShapeDtypeStruct((num_splits, 1), jnp.float32)
    scalar_spec = pl.BlockSpec((1, 1), lambda sj, si: (sj, 0),
                               memory_space=pltpu.SMEM)

    kernel = functools.partial(
        _binarization_loss_kernel,
        eps=eps, tile_r=tile_r, n_cols=n_cols,
        tiles_per_split=tiles_per_split, n_rows=n_rows,
        first_masked_tile=first_masked_tile, any_masked=any_masked,
        n_chunks=n_chunks, acc_rows=acc_rows)

    bytes_accessed = (h2.size * h2.dtype.itemsize
                      + s2.size * s2.dtype.itemsize
                      + 2 * num_splits * 4)

    num, den = pl.pallas_call(
        kernel,
        out_shape=(scalar_out, scalar_out),
        grid_spec=pltpu.PrefetchScalarGridSpec(
            num_scalar_prefetch=0,
            grid=(num_splits, tiles_per_split),
            in_specs=[
                pl.BlockSpec((tile_r, n_cols), tile_map),
                pl.BlockSpec((tile_r, n_cols), tile_map),
            ],
            out_specs=(scalar_spec, scalar_spec),
            scratch_shapes=[
                pltpu.VMEM((acc_rows, n_cols), jnp.float32),
                pltpu.VMEM((acc_rows, n_cols), jnp.float32),
            ],
        ),
        compiler_params=pltpu.CompilerParams(
            dimension_semantics=("parallel", "arbitrary")),
        cost_estimate=pl.CostEstimate(
            flops=6 * n_full,
            transcendentals=n_full,
            bytes_accessed=bytes_accessed),
    )(h2, s2)

    # Combine per-split partials + ragged tail, then the final divide.
    num_total = jnp.sum(num) + tail_num
    den_total = jnp.sum(den) + tail_den
    return -num_total / den_total


def attention_binarization_loss_ref(hard_attention, soft_attention, eps=1e-12):
    """Pure-JAX reference of the PyTorch forward pass."""
    hard = hard_attention.astype(jnp.float32)
    soft = soft_attention.astype(jnp.float32)
    masked = jnp.where(hard == 1.0, jnp.log(jnp.maximum(soft, eps)), 0.0)
    return -jnp.sum(masked) / jnp.sum(hard)


def _make_inputs(key, b, c, t_mel, t_text, soft_dtype=jnp.float32):
    k_hard, k_soft = jax.random.split(key)
    # hard attention: one-hot along the text axis for every mel frame (binary)
    hard_idx = jax.random.randint(k_hard, (b, c, t_mel), 0, t_text)
    hard = jax.nn.one_hot(hard_idx, t_text, dtype=jnp.float32)
    # soft attention: softmax over text axis of random logits
    logits = jax.random.normal(k_soft, (b, c, t_mel, t_text), dtype=jnp.float32)
    soft = jax.nn.softmax(logits, axis=-1).astype(soft_dtype)
    return hard, soft


if __name__ == "__main__":
    key = jax.random.PRNGKey(0)
    k1, k2 = jax.random.split(key)

    # Case 1: lane-aligned shapes [B, 1, T_mel, T_text], f32.
    hard1, soft1 = _make_inputs(k1, 2, 1, 16, 16, jnp.float32)
    loss1 = jax.block_until_ready(attention_binarization_loss(hard1, soft1))
    ref1 = attention_binarization_loss_ref(hard1, soft1)
    assert jnp.allclose(loss1, ref1, rtol=1e-5, atol=1e-6), (loss1, ref1)

    # Case 2: non-128-divisible element count + bf16 soft (exercises the
    # wrapper-side ragged tail and the in-kernel upcast paths).
    hard2, soft2 = _make_inputs(k2, 2, 1, 19, 23, jnp.bfloat16)
    loss2 = jax.block_until_ready(attention_binarization_loss(hard2, soft2))
    ref2 = attention_binarization_loss_ref(hard2, soft2)
    assert jnp.allclose(loss2, ref2, rtol=1e-5, atol=1e-6), (loss2, ref2)

    print("KERNEL_OK")
</pallas_src>

<mosaic_0001>
module attributes {stable_mosaic.version = 11 : i64} {
  func.func @_binarization_loss_kernel(%arg0: i32, %arg1: i32, %arg2: memref<4x128xf32, #tpu.memory_space<vmem>>, %arg3: memref<4x128xf32, #tpu.memory_space<vmem>>, %arg4: memref<1x1xf32, #tpu.memory_space<smem>>, %arg5: memref<1x1xf32, #tpu.memory_space<smem>>, %arg6: memref<4x128xf32, #tpu.memory_space<vmem>>, %arg7: memref<4x128xf32, #tpu.memory_space<vmem>>) attributes {dimension_semantics = [#tpu.dimension_semantics<parallel>, #tpu.dimension_semantics<arbitrary>], iteration_bounds = array<i64: 1, 1>, scalar_prefetch = 0 : i64, scratch_operands = 2 : i64, tpu.core_type = #tpu.core_type<tc>, window_params = [{transform_indices = @transform_0, window_bounds = array<i64: 4, 128>}, {transform_indices = @transform_1, window_bounds = array<i64: 4, 128>}, {transform_indices = @transform_2, window_bounds = array<i64: 1, 1>}, {transform_indices = @transform_3, window_bounds = array<i64: 1, 1>}]} {
    %c0_i32 = arith.constant 0 : i32
    %0 = arith.cmpi eq, %arg1, %c0_i32 : i32
    %1 = arith.extui %0 : i1 to i32
    %c0_i32_0 = arith.constant 0 : i32
    %2 = arith.cmpi ne, %1, %c0_i32_0 : i32
    scf.if %2 {
      %cst_18 = arith.constant 0.000000e+00 : f32
      %25 = vector.broadcast %cst_18 : f32 to vector<4x128xf32>
      %c0_19 = arith.constant 0 : index
      %c0_20 = arith.constant 0 : index
      %26 = vector.load %arg6[%c0_19, %c0_20] : memref<4x128xf32, #tpu.memory_space<vmem>>, vector<4x128xf32>
      tpu.vector_store %arg6[%c0_19, %c0_20], %25 {strides = array<i32>} : memref<4x128xf32, #tpu.memory_space<vmem>>, vector<4x128xf32>,
      %cst_21 = arith.constant 0.000000e+00 : f32
      %27 = vector.broadcast %cst_21 : f32 to vector<4x128xf32>
      %c0_22 = arith.constant 0 : index
      %c0_23 = arith.constant 0 : index
      %28 = vector.load %arg7[%c0_22, %c0_23] : memref<4x128xf32, #tpu.memory_space<vmem>>, vector<4x128xf32>
      tpu.vector_store %arg7[%c0_22, %c0_23], %27 {strides = array<i32>} : memref<4x128xf32, #tpu.memory_space<vmem>>, vector<4x128xf32>,
    } else {
    }
    %c0 = arith.constant 0 : index
    %c0_1 = arith.constant 0 : index
    %3 = vector.load %arg2[%c0, %c0_1] : memref<4x128xf32, #tpu.memory_space<vmem>>, vector<4x128xf32>
    %c0_2 = arith.constant 0 : index
    %c0_3 = arith.constant 0 : index
    %4 = vector.load %arg3[%c0_2, %c0_3] : memref<4x128xf32, #tpu.memory_space<vmem>>, vector<4x128xf32>
    %cst = arith.constant 1.000000e+00 : f32
    %5 = vector.broadcast %cst : f32 to vector<4x128xf32>
    %6 = arith.cmpf oeq, %3, %5 : vector<4x128xf32>
    %cst_4 = arith.constant 1.000000e+00 : f32
    %7 = vector.broadcast %cst_4 : f32 to vector<4x128xf32>
    %8 = arith.select %6, %4, %7 : vector<4x128xi1>, vector<4x128xf32>
    %cst_5 = arith.constant 9.99999996E-13 : f32
    %9 = vector.broadcast %cst_5 : f32 to vector<4x128xf32>
    %10 = arith.maximumf %8, %9 : vector<4x128xf32>
    %11 = math.log %10 : vector<4x128xf32>
    %c0_6 = arith.constant 0 : index
    %c0_7 = arith.constant 0 : index
    %12 = vector.load %arg6[%c0_6, %c0_7] : memref<4x128xf32, #tpu.memory_space<vmem>>, vector<4x128xf32>
    %13 = vector.shape_cast %11 : vector<4x128xf32> to vector<1x4x128xf32>
    %cst_8 = arith.constant dense<0.000000e+00> : vector<4x128xf32>
    %14 = vector.multi_reduction <add>, %13, %cst_8 [0] : vector<1x4x128xf32> to vector<4x128xf32>
    %15 = arith.addf %12, %14 : vector<4x128xf32>
    %c0_9 = arith.constant 0 : index
    %c0_10 = arith.constant 0 : index
    %16 = vector.load %arg6[%c0_9, %c0_10] : memref<4x128xf32, #tpu.memory_space<vmem>>, vector<4x128xf32>
    tpu.vector_store %arg6[%c0_9, %c0_10], %15 {strides = array<i32>} : memref<4x128xf32, #tpu.memory_space<vmem>>, vector<4x128xf32>,
    %c0_11 = arith.constant 0 : index
    %c0_12 = arith.constant 0 : index
    %17 = vector.load %arg7[%c0_11, %c0_12] : memref<4x128xf32, #tpu.memory_space<vmem>>, vector<4x128xf32>
    %18 = vector.shape_cast %3 : vector<4x128xf32> to vector<1x4x128xf32>
    %cst_13 = arith.constant dense<0.000000e+00> : vector<4x128xf32>
    %19 = vector.multi_reduction <add>, %18, %cst_13 [0] : vector<1x4x128xf32> to vector<4x128xf32>
    %20 = arith.addf %17, %19 : vector<4x128xf32>
    %c0_14 = arith.constant 0 : index
    %c0_15 = arith.constant 0 : index
    %21 = vector.load %arg7[%c0_14, %c0_15] : memref<4x128xf32, #tpu.memory_space<vmem>>, vector<4x128xf32>
    tpu.vector_store %arg7[%c0_14, %c0_15], %20 {strides = array<i32>} : memref<4x128xf32, #tpu.memory_space<vmem>>, vector<4x128xf32>,
    %c0_i32_16 = arith.constant 0 : i32
    %22 = arith.cmpi eq, %arg1, %c0_i32_16 : i32
    %23 = arith.extui %22 : i1 to i32
    %c0_i32_17 = arith.constant 0 : i32
    %24 = arith.cmpi ne, %23, %c0_i32_17 : i32
    scf.if %24 {
      %c0_18 = arith.constant 0 : index
      %c0_19 = arith.constant 0 : index
      %25 = vector.load %arg6[%c0_18, %c0_19] : memref<4x128xf32, #tpu.memory_space<vmem>>, vector<4x128xf32>
      %26 = vector.shape_cast %25 : vector<4x128xf32> to vector<1x4x128xf32>
      %cst_20 = arith.constant dense<0.000000e+00> : vector<1xf32>
      %27 = vector.multi_reduction <add>, %26, %cst_20 [1, 2] : vector<1x4x128xf32> to vector<1xf32>
      %28 = vector.shape_cast %27 : vector<1xf32> to vector<1x1x1xf32>
      %29 = vector.extract %28[0, 0, 0] : f32 from vector<1x1x1xf32>
      %c0_21 = arith.constant 0 : index
      %c0_22 = arith.constant 0 : index
      %30 = memref.load %arg4[%c0_21, %c0_22] : memref<1x1xf32, #tpu.memory_space<smem>>
      memref.store %29, %arg4[%c0_21, %c0_22] : memref<1x1xf32, #tpu.memory_space<smem>>
      %c0_23 = arith.constant 0 : index
      %c0_24 = arith.constant 0 : index
      %31 = vector.load %arg7[%c0_23, %c0_24] : memref<4x128xf32, #tpu.memory_space<vmem>>, vector<4x128xf32>
      %32 = vector.shape_cast %31 : vector<4x128xf32> to vector<1x4x128xf32>
      %cst_25 = arith.constant dense<0.000000e+00> : vector<1xf32>
      %33 = vector.multi_reduction <add>, %32, %cst_25 [1, 2] : vector<1x4x128xf32> to vector<1xf32>
      %34 = vector.shape_cast %33 : vector<1xf32> to vector<1x1x1xf32>
      %35 = vector.extract %34[0, 0, 0] : f32 from vector<1x1x1xf32>
      %c0_26 = arith.constant 0 : index
      %c0_27 = arith.constant 0 : index
      %36 = memref.load %arg5[%c0_26, %c0_27] : memref<1x1xf32, #tpu.memory_space<smem>>
      memref.store %35, %arg5[%c0_26, %c0_27] : memref<1x1xf32, #tpu.memory_space<smem>>
    } else {
    }
    return
  }
  func.func @transform_0(%arg0: i32, %arg1: i32) -> (i32, i32) {
    %c1_i32 = arith.constant 1 : i32
    %0 = arith.muli %arg0, %c1_i32 : i32
    %1 = arith.addi %0, %arg1 : i32
    %c0_i32 = arith.constant 0 : i32
    %2 = arith.minsi %1, %c0_i32 : i32
    %c0_i32_0 = arith.constant 0 : i32
    %c0_i32_1 = arith.constant 0 : i32
    return %2, %c0_i32_0 : i32, i32
  }
  func.func @transform_1(%arg0: i32, %arg1: i32) -> (i32, i32) {
    %c1_i32 = arith.constant 1 : i32
    %0 = arith.muli %arg0, %c1_i32 : i32
    %1 = arith.addi %0, %arg1 : i32
    %c0_i32 = arith.constant 0 : i32
    %2 = arith.minsi %1, %c0_i32 : i32
    %c0_i32_0 = arith.constant 0 : i32
    %c0_i32_1 = arith.constant 0 : i32
    return %2, %c0_i32_0 : i32, i32
  }
  func.func @transform_2(%arg0: i32, %arg1: i32) -> (i32, i32) {
    %c0_i32 = arith.constant 0 : i32
    %c0_i32_0 = arith.constant 0 : i32
    return %arg0, %c0_i32 : i32, i32
  }
  func.func @transform_3(%arg0: i32, %arg1: i32) -> (i32, i32) {
    %c0_i32 = arith.constant 0 : i32
    %c0_i32_0 = arith.constant 0 : i32
    return %arg0, %c0_i32 : i32, i32
  }
}

</mosaic_0001>

<llo_original>
// kernel: tpu_custom_call.1
$region0: #{tpu_custom_call.1}
  #allocation0 [shape = 'u32[]', space=smem, size = 0x4, offset = 0x4, fixed_abs, tag = 'smem constant byte address 0x4 - core index']
  #allocation1 [shape = 'u32[144,128]{1,0:T(1,128)}', space=vmem, size = 0x12000, scoped, tag = 'internal scratch']
  #allocation2 [shape = 'f32[4,128]{1,0:T(4,128)}', space=vmem, size = 0x800, scoped, tag = 'scratch operand']
  #allocation3 [shape = 'f32[4,128]{1,0:T(4,128)}', space=vmem, size = 0x800, scoped, tag = 'scratch operand']
  %s0 = inlined_call_operand.hbm [shape: f32[4,128], index: 0, kind: input, shape index: {}]
  %s1 = inlined_call_operand.hbm [shape: f32[4,128], index: 1, kind: input, shape index: {}]
  %s2 = inlined_call_operand.hbm [shape: f32[1,1], index: 2, kind: output, shape index: {0}]
  %s3 = inlined_call_operand.hbm [shape: f32[1,1], index: 3, kind: output, shape index: {1}]
  %4 = xla_tuple %s2, %s3
  %s5 = sld [smem:[#allocation0]]
  $region42: #{tpu_custom_call.1} parent=0
    _
  %s7 = ssub.s32 1, %s5
  %s8 = scalar_select 0, %s7, %s5
  $region1: #{tpu_custom_call.1} parent=0
    #allocation4 [shape = 'u8[2048]{0}', space=vmem, size = 0x800, scoped, tag = 'input window, operand 0, single buffered']
    #allocation5 [shape = 's32[1]{0}', space=sflag, size = 0x4, scoped, tag = 'scoped memory for tpu_custom_call.1']
    #allocation6 [shape = 's32[1]{0}', space=sflag, size = 0x4, scoped, tag = 'scoped memory for tpu_custom_call.1']
    #allocation7 [shape = 'u8[2048]{0}', space=vmem, size = 0x800, scoped, tag = 'input window, operand 1, single buffered']
    #allocation8 [shape = 's32[1]{0}', space=sflag, size = 0x4, scoped, tag = 'scoped memory for tpu_custom_call.1']
    #allocation9 [shape = 'u8[512]{0}', space=smem, size = 0x200, scoped, tag = 'output window, operand 0, single buffered']
    #allocation10 [shape = 'u8[512]{0}', space=smem, size = 0x200, scoped, tag = 'output window, operand 1, single buffered']
    #allocation11 [shape = 's32[1]{0}', space=sflag, size = 0x4, scoped, tag = 'scoped memory for tpu_custom_call.1']
    %9 = vsyncpa [#allocation5], 0
    %10 = vsyncpa [#allocation8], 0
    %11 = vsyncpa [#allocation6], 0
    %12 = vsyncpa [#allocation11], 0
    // Predicated region
    $region2: #{tpu_custom_call.1} parent=1 // pred_check
      _
    $region3: #{tpu_custom_call.1} parent=1 // pred_check_branch
      %14 = sbr.rel (0) target = $region5
    $region4: #{tpu_custom_call.1} parent=1 // pred_region
      %s15 = sadd.s32 0, 0
      %p16 = scmp.lt.s32.totalorder %s15, 0
      %s17 = scalar_select %p16, %s15, 0
      %s19 = ssub.s32 64, 64
      %20 = vsyncadd [#allocation5], %s19
      %s21 = smul.addr %s17, 64
      %s22 = scalar_lea.hbm %s0, %s21
      %s24 = sshll.u32 [#allocation4], 4
      %s25 = int_to_ptr.vmem [resolvable:$true] %s24
      %27 = dma.hbm_to_vmem [thread:$0]  %s22, 64, %s25, [#allocation5]
    $region5: #{tpu_custom_call.1} parent=1 // pred_fallthru
      _
    // Predicated region
    $region6: #{tpu_custom_call.1} parent=1 // pred_check
      _
    $region7: #{tpu_custom_call.1} parent=1 // pred_check_branch
      %29 = sbr.rel (0) target = $region9
    $region8: #{tpu_custom_call.1} parent=1 // pred_region
      %s30 = sadd.s32 0, 0
      %p31 = scmp.lt.s32.totalorder %s30, 0
      %s32 = scalar_select %p31, %s30, 0
      %s34 = ssub.s32 64, 64
      %35 = vsyncadd [#allocation8], %s34
      %s36 = smul.addr %s32, 64
      %s37 = scalar_lea.hbm %s1, %s36
      %s39 = sshll.u32 [#allocation7], 4
      %s40 = int_to_ptr.vmem [resolvable:$true] %s39
      %42 = dma.hbm_to_vmem [thread:$0]  %s37, 64, %s40, [#allocation8]
    $region9: #{tpu_custom_call.1} parent=1 // pred_fallthru
      _
    // Predicated region
    $region10: #{tpu_custom_call.1} parent=1 // pred_check
      _
    $region11: #{tpu_custom_call.1} parent=1 // pred_check_branch
      %44 = sbr.rel (0) target = $region13
    $region12: #{tpu_custom_call.1} parent=1 // pred_region
      %45 = dma.done [#allocation5], 64
    $region13: #{tpu_custom_call.1} parent=1 // pred_fallthru
      _
    // Predicated region
    $region14: #{tpu_custom_call.1} parent=1 // pred_check
      _
    $region15: #{tpu_custom_call.1} parent=1 // pred_check_branch
      %47 = sbr.rel (0) target = $region17
    $region16: #{tpu_custom_call.1} parent=1 // pred_region
      %48 = dma.done [#allocation8], 64
    $region17: #{tpu_custom_call.1} parent=1 // pred_fallthru
      _
    %s49 = sadd.s32 0, 0
    %p50 = scmp.lt.s32.totalorder %s49, 0
    %s51 = scalar_select %p50, %s49, 0
    %s52 = sadd.s32 0, 0
    %p53 = scmp.lt.s32.totalorder %s52, 0
    %s54 = scalar_select %p53, %s52, 0
    %p55 = scmp.eq.s32.totalorder 0, 0
    // Predicated region
    $region18: #{tpu_custom_call.1} parent=1 // pred_check
      %p56 = pneg %p55
    $region19: #{tpu_custom_call.1} parent=1 // pred_check_branch
      %58 = sbr.rel (%p56) target = $region21
    $region20: #{tpu_custom_call.1} parent=1 // pred_region
      %59 = vst [vmem:[#allocation2] sm:$0xf] 0.0
      %60 = vst [vmem:[#allocation3] sm:$0xf] 0.0
    $region21: #{tpu_custom_call.1} parent=1 // pred_fallthru
      _
    %v61 = vld [vmem:[#allocation4] sm:$0xf]
    %v62 = vld [vmem:[#allocation7] sm:$0xf]
    %vm63 = vcmp.eq.f32.partialorder %v61, 1.0
    %v64 = vsel %vm63, %v62, 1.0
    %v65 = vmax.f32 %v64, 1e-12
    %v66 = vlog2.pop %v65
    %v67 = vmul.f32 %v66, 0.6931472
    %v68 = vld [vmem:[#allocation2] sm:$0xf]
    %v69 = vadd.f32 %v67, 0.0
    %v70 = vadd.f32 %v68, %v69
    %71 = vst [vmem:[#allocation2] sm:$0xf] %v70
    %v72 = vld [vmem:[#allocation3] sm:$0xf]
    %v73 = vadd.f32 %v61, 0.0
    %v74 = vadd.f32 %v72, %v73
    %75 = vst [vmem:[#allocation3] sm:$0xf] %v74
    // Predicated region
    $region22: #{tpu_custom_call.1} parent=1 // pred_check
      %p76 = pneg %p55
    $region23: #{tpu_custom_call.1} parent=1 // pred_check_branch
      %78 = sbr.rel (%p76) target = $region25
    $region24: #{tpu_custom_call.1} parent=1 // pred_region
      %v79 = vld [vmem:[#allocation2] sm:$0xf]
      %vm80 = vcmask 1043456
      %v81 = vsel %vm80, %v79, 0.0
      %82 = vadd.xlane.f32.xlu0 %v81
      %v83 = vpop.xlane.xlu0 %82
      %v84 = vrot.slane %v83, 4
      %v85 = vadd.f32 %v83, %v84
      %v86 = vrot.slane %v85, 2
      %v87 = vadd.f32 %v85, %v86
      %v88 = vrot.slane %v87, 1
      %v89 = vadd.f32 %v87, %v88
      %s90 = vtos %v89
      %s91 = scalar_lea.smem [#allocation9], 0
      %92 = sst [smem:[%s91]] %s90
      %v93 = vld [vmem:[#allocation3] sm:$0xf]
      %v94 = vsel %vm80, %v93, 0.0
      %95 = vadd.xlane.f32.xlu0 %v94
      %v96 = vpop.xlane.xlu0 %95
      %v97 = vrot.slane %v96, 4
      %v98 = vadd.f32 %v96, %v97
      %v99 = vrot.slane %v98, 2
      %v100 = vadd.f32 %v98, %v99
      %v101 = vrot.slane %v100, 1
      %v102 = vadd.f32 %v100, %v101
      %s103 = vtos %v102
      %s104 = scalar_lea.smem [#allocation10], 0
      %105 = sst [smem:[%s104]] %s103
    $region25: #{tpu_custom_call.1} parent=1 // pred_fallthru
      _
    // Predicated region
    $region26: #{tpu_custom_call.1} parent=1 // pred_check
      _
    $region27: #{tpu_custom_call.1} parent=1 // pred_check_branch
      %107 = sbr.rel (0) target = $region29
    $region28: #{tpu_custom_call.1} parent=1 // pred_region
      %s109 = ssub.s32 16, 16
      %110 = vsyncadd [#allocation6], %s109
      %113 = dma.smem_to_hbm [#allocation9], 16, %s2, [#allocation6]
    $region29: #{tpu_custom_call.1} parent=1 // pred_fallthru
      _
    // Predicated region
    $region30: #{tpu_custom_call.1} parent=1 // pred_check
      _
    $region31: #{tpu_custom_call.1} parent=1 // pred_check_branch
      %115 = sbr.rel (0) target = $region33
    $region32: #{tpu_custom_call.1} parent=1 // pred_region
      %s117 = ssub.s32 16, 16
      %118 = vsyncadd [#allocation11], %s117
      %121 = dma.smem_to_hbm [#allocation10], 16, %s3, [#allocation11]
    $region33: #{tpu_custom_call.1} parent=1 // pred_fallthru
      _
    // Predicated region
    $region34: #{tpu_custom_call.1} parent=1 // pred_check
      _
    $region35: #{tpu_custom_call.1} parent=1 // pred_check_branch
      %123 = sbr.rel (0) target = $region37
    $region36: #{tpu_custom_call.1} parent=1 // pred_region
      %124 = dma.done [#allocation6], 16
    $region37: #{tpu_custom_call.1} parent=1 // pred_fallthru
      _
    // Predicated region
    $region38: #{tpu_custom_call.1} parent=1 // pred_check
      _
    $region39: #{tpu_custom_call.1} parent=1 // pred_check_branch
      %126 = sbr.rel (0) target = $region41
    $region40: #{tpu_custom_call.1} parent=1 // pred_region
      %127 = dma.done [#allocation11], 16
    $region41: #{tpu_custom_call.1} parent=1 // pred_fallthru
      _
    %128 = sfence
    %129 = vsyncpa [#allocation5], 1
    %130 = vsyncpa [#allocation8], 1
    %131 = vsyncpa [#allocation6], 1
    %132 = vsyncpa [#allocation11], 1

</llo_original>
